<compile_context>
chip_gen: v6e
topology: v6e:2x2x1
jax: 0.10.0
libtpu: 0.0.40
codegen_flags: <defaults>
</compile_context>

<pallas_src>
import functools
import math

import jax
import jax.numpy as jnp
from jax.experimental import pallas as pl
from jax.experimental.pallas import tpu as pltpu


def _rank_loss_kernel(sig_ref, basis_ref, bpm_ref, bias_ref, lo_ref, hi_ref,
                      out_ref):
    Fp = bpm_ref.shape[-1]
    B = lo_ref.shape[0]

    # One fused MXU matmul: (3B, T) x (T, 2*Fp) -> (3B, 2*Fp), f32 accumulate.
    reim = jnp.dot(sig_ref[...], basis_ref[...],
                   preferred_element_type=jnp.float32)
    re = reim[:, :Fp]
    im = reim[:, Fp:]
    psd = re * re + im * im                                   # (3B, Fp) f32

    # Deterministic soft-argmax over in-band frequencies (bpm).  Padded lanes
    # carry a -1e30 bias so exp() underflows to exactly 0 there.
    z = psd + bias_ref[...]
    z = z - jnp.max(z, axis=-1, keepdims=True)
    e = jnp.exp(z)
    num = jnp.sum(e * bpm_ref[...], axis=-1, keepdims=True)   # (3B, 1)
    den = jnp.sum(e, axis=-1, keepdims=True)                  # (3B, 1)
    hr = num * pl.reciprocal(den, approx=True)                # (3B, 1)

    hr_a = hr[0:B]
    hr_up = hr[B:2 * B]
    hr_dn = hr[2 * B:3 * B]

    # judge = (hr_a >= 40 / ff_down) & (hr_a <= 180 / ff_up)  (thresholds are
    # precomputed on the host as lo/hi).
    judge = jnp.logical_and(hr_a >= lo_ref[...], hr_a <= hi_ref[...])
    jf = judge.astype(jnp.float32)
    cnt = jnp.sum(jf, keepdims=True)                          # (1, 1)

    # MarginRankingLoss(margin=0, reduction='mean') with target y = -1:
    #   loss(x1, x2) = mean(relu(x1 - x2)) over judged samples.
    loss1 = jnp.sum(jnp.maximum(hr_up - hr_a, 0.0) * jf, keepdims=True)
    loss2 = jnp.sum(jnp.maximum(hr_a - hr_dn, 0.0) * jf, keepdims=True)
    loss = jnp.where(cnt > 0.0, (loss1 + loss2) / jnp.maximum(cnt, 1.0), 0.0)
    out_ref[...] = loss


@functools.lru_cache(maxsize=8)
def _dft_constants(fs, T, N):
    """Pre-centered, lane-padded band-limited DFT basis (cached per (fs,T,N))."""
    k_lo = int(math.ceil(40.0 * N / (60.0 * fs)))
    k_hi = min(int(math.floor(180.0 * N / (60.0 * fs))), N // 2)
    k_band = jnp.arange(k_lo, k_hi + 1, dtype=jnp.float32)              # (F,)
    F = int(k_band.shape[0])
    Fp = max(128, ((F + 127) // 128) * 128)                             # lane-aligned

    bpm = k_band * (fs / N) * 60.0                                      # (F,)
    t = jnp.arange(T, dtype=jnp.float32)
    ang = (2.0 * math.pi / N) * t[:, None] * k_band[None, :]            # (T, F)
    cos_mat = jnp.cos(ang)
    sin_mat = -jnp.sin(ang)
    # Pre-center over t: (x - mean(x))·C == x·(C - column_mean(C)).
    cos_mat = cos_mat - jnp.mean(cos_mat, axis=0, keepdims=True)
    sin_mat = sin_mat - jnp.mean(sin_mat, axis=0, keepdims=True)

    pad = Fp - F
    cos_pad = jnp.pad(cos_mat, ((0, 0), (0, pad)))
    sin_pad = jnp.pad(sin_mat, ((0, 0), (0, pad)))
    basis = jnp.concatenate([cos_pad, sin_pad], axis=1).astype(jnp.bfloat16)

    bpm_pad = jnp.pad(bpm, (0, pad)).reshape(1, Fp).astype(jnp.float32)
    bias = jnp.concatenate(
        [jnp.zeros((F,), jnp.float32),
         jnp.full((pad,), -1e30, jnp.float32)]).reshape(1, Fp)
    return basis, bpm_pad, bias


def rank_loss(fs, model_output, N=1800):
    """JAX / Pallas equivalent of RankLoss.forward."""
    y_a, y_up, y_down, ff_up, ff_down = model_output
    fs = float(fs)  # mirrors fs.item() in the torch module
    B, T = y_a.shape

    basis, bpm_pad, bias = _dft_constants(fs, T, N)

    # Stack the three signals into one (3B, T) bf16 LHS (one matmul, one DMA).
    sig = jnp.concatenate(
        [jnp.asarray(y_a, jnp.float32),
         jnp.asarray(y_up, jnp.float32),
         jnp.asarray(y_down, jnp.float32)], axis=0).astype(jnp.bfloat16)

    lo = (40.0 / jnp.asarray(ff_down, jnp.float32)).reshape(B, 1)
    hi = (180.0 / jnp.asarray(ff_up, jnp.float32)).reshape(B, 1)

    out = pl.pallas_call(
        _rank_loss_kernel,
        out_shape=jax.ShapeDtypeStruct((1, 1), jnp.float32),
        in_specs=[pl.BlockSpec(memory_space=pltpu.MemorySpace.VMEM)] * 6,
        out_specs=pl.BlockSpec(memory_space=pltpu.MemorySpace.VMEM),
    )(sig, basis, bpm_pad, bias, lo, hi)
    return out[0, 0]


if __name__ == "__main__":
    key = jax.random.PRNGKey(0)
    k1, k2, k3, k4, k5 = jax.random.split(key, 5)

    B, T = 4, 128
    fs = 30.0

    # synthetic rPPG-like signals: dominant sinusoid + noise
    t = jnp.arange(T, dtype=jnp.float32) / fs
    y_a = jnp.sin(2.0 * math.pi * 1.2 * t)[None, :] \
        + 0.1 * jax.random.normal(k1, (B, T), dtype=jnp.float32)   # ~72 bpm
    y_up = jnp.sin(2.0 * math.pi * 1.8 * t)[None, :] \
        + 0.1 * jax.random.normal(k2, (B, T), dtype=jnp.float32)   # ~108 bpm
    y_down = jnp.sin(2.0 * math.pi * 0.8 * t)[None, :] \
        + 0.1 * jax.random.normal(k3, (B, T), dtype=jnp.float32)   # ~48 bpm
    ff_up = jax.random.uniform(k4, (B,), minval=1.2, maxval=1.6, dtype=jnp.float32)
    ff_down = jax.random.uniform(k5, (B,), minval=0.6, maxval=0.9, dtype=jnp.float32)

    loss = rank_loss(fs, (y_a, y_up, y_down, ff_up, ff_down), N=1800)
    loss = jax.block_until_ready(loss)
    assert bool(jnp.isfinite(loss))
    print("KERNEL_OK")
</pallas_src>

<mosaic_0001>
module attributes {stable_mosaic.version = 11 : i64} {
  func.func @_rank_loss_kernel(%arg0: memref<12x128xbf16, #tpu.memory_space<vmem>>, %arg1: memref<128x512xbf16, #tpu.memory_space<vmem>>, %arg2: memref<1x256xf32, #tpu.memory_space<vmem>>, %arg3: memref<1x256xf32, #tpu.memory_space<vmem>>, %arg4: memref<4x1xf32, #tpu.memory_space<vmem>>, %arg5: memref<4x1xf32, #tpu.memory_space<vmem>>, %arg6: memref<1x1xf32, #tpu.memory_space<vmem>>) attributes {dimension_semantics = [], scalar_prefetch = 0 : i64, scratch_operands = 0 : i64, tpu.core_type = #tpu.core_type<tc>} {
    %c0 = arith.constant 0 : index
    %c0_0 = arith.constant 0 : index
    %0 = vector.load %arg0[%c0, %c0_0] : memref<12x128xbf16, #tpu.memory_space<vmem>>, vector<12x128xbf16>
    %c0_1 = arith.constant 0 : index
    %c0_2 = arith.constant 0 : index
    %1 = vector.load %arg1[%c0_1, %c0_2] : memref<128x512xbf16, #tpu.memory_space<vmem>>, vector<128x512xbf16>
    %cst = arith.constant dense<0.000000e+00> : vector<12x512xf32>
    %2 = tpu.matmul %0, %1, %cst {dimension_numbers = #tpu.dot_dimension_numbers<[1], [0], [0], [1], [0, 0, 1, 1], [], []>} : vector<12x128xbf16>, vector<128x512xbf16>, vector<12x512xf32> -> vector<12x512xf32>
    %3 = vector.extract_strided_slice %2 {offsets = [0, 0], sizes = [12, 256], strides = [1, 1]} : vector<12x512xf32> to vector<12x256xf32>
    %4 = vector.extract_strided_slice %2 {offsets = [0, 256], sizes = [12, 256], strides = [1, 1]} : vector<12x512xf32> to vector<12x256xf32>
    %5 = arith.mulf %3, %3 : vector<12x256xf32>
    %6 = arith.mulf %4, %4 : vector<12x256xf32>
    %7 = arith.addf %5, %6 : vector<12x256xf32>
    %c0_3 = arith.constant 0 : index
    %c0_4 = arith.constant 0 : index
    %8 = vector.load %arg3[%c0_3, %c0_4] : memref<1x256xf32, #tpu.memory_space<vmem>>, vector<1x256xf32>
    %9 = vector.broadcast %8 : vector<1x256xf32> to vector<12x256xf32>
    %10 = arith.addf %7, %9 : vector<12x256xf32>
    %cst_5 = arith.constant dense<0xFF800000> : vector<12xf32>
    %11 = vector.multi_reduction <maximumf>, %10, %cst_5 [1] : vector<12x256xf32> to vector<12xf32>
    %12 = vector.shape_cast %11 : vector<12xf32> to vector<12x1xf32>
    %13 = vector.broadcast %12 : vector<12x1xf32> to vector<12x256xf32>
    %14 = arith.subf %10, %13 : vector<12x256xf32>
    %15 = math.exp %14 : vector<12x256xf32>
    %c0_6 = arith.constant 0 : index
    %c0_7 = arith.constant 0 : index
    %16 = vector.load %arg2[%c0_6, %c0_7] : memref<1x256xf32, #tpu.memory_space<vmem>>, vector<1x256xf32>
    %17 = vector.broadcast %16 : vector<1x256xf32> to vector<12x256xf32>
    %18 = arith.mulf %15, %17 : vector<12x256xf32>
    %cst_8 = arith.constant dense<0.000000e+00> : vector<12xf32>
    %19 = vector.multi_reduction <add>, %18, %cst_8 [1] : vector<12x256xf32> to vector<12xf32>
    %20 = vector.shape_cast %19 : vector<12xf32> to vector<12x1xf32>
    %cst_9 = arith.constant dense<0.000000e+00> : vector<12xf32>
    %21 = vector.multi_reduction <add>, %15, %cst_9 [1] : vector<12x256xf32> to vector<12xf32>
    %22 = vector.shape_cast %21 : vector<12xf32> to vector<12x1xf32>
    %23 = tpu.reciprocal %22 {approx = true} : vector<12x1xf32> -> vector<12x1xf32>
    %24 = arith.mulf %20, %23 : vector<12x1xf32>
    %25 = vector.extract_strided_slice %24 {offsets = [0, 0], sizes = [4, 1], strides = [1, 1]} : vector<12x1xf32> to vector<4x1xf32>
    %26 = vector.extract_strided_slice %24 {offsets = [4, 0], sizes = [4, 1], strides = [1, 1]} : vector<12x1xf32> to vector<4x1xf32>
    %27 = vector.extract_strided_slice %24 {offsets = [8, 0], sizes = [4, 1], strides = [1, 1]} : vector<12x1xf32> to vector<4x1xf32>
    %c0_10 = arith.constant 0 : index
    %c0_11 = arith.constant 0 : index
    %28 = vector.load %arg4[%c0_10, %c0_11] : memref<4x1xf32, #tpu.memory_space<vmem>>, vector<4x1xf32>
    %29 = arith.cmpf oge, %25, %28 : vector<4x1xf32>
    %c0_12 = arith.constant 0 : index
    %c0_13 = arith.constant 0 : index
    %30 = vector.load %arg5[%c0_12, %c0_13] : memref<4x1xf32, #tpu.memory_space<vmem>>, vector<4x1xf32>
    %31 = arith.cmpf ole, %25, %30 : vector<4x1xf32>
    %32 = arith.andi %29, %31 : vector<4x1xi1>
    %33 = arith.extui %32 : vector<4x1xi1> to vector<4x1xi32>
    %34 = arith.sitofp %33 : vector<4x1xi32> to vector<4x1xf32>
    %35 = vector.shape_cast %34 : vector<4x1xf32> to vector<1x4x1xf32>
    %cst_14 = arith.constant dense<0.000000e+00> : vector<1xf32>
    %36 = vector.multi_reduction <add>, %35, %cst_14 [1, 2] : vector<1x4x1xf32> to vector<1xf32>
    %37 = vector.shape_cast %36 : vector<1xf32> to vector<1x1x1xf32>
    %38 = vector.extract %37[0, 0, 0] : f32 from vector<1x1x1xf32>
    %39 = vector.broadcast %38 : f32 to vector<1x1xf32>
    %40 = arith.subf %26, %25 : vector<4x1xf32>
    %cst_15 = arith.constant 0.000000e+00 : f32
    %41 = vector.broadcast %cst_15 : f32 to vector<4x1xf32>
    %42 = arith.maximumf %40, %41 : vector<4x1xf32>
    %43 = arith.mulf %42, %34 : vector<4x1xf32>
    %44 = vector.shape_cast %43 : vector<4x1xf32> to vector<1x4x1xf32>
    %cst_16 = arith.constant dense<0.000000e+00> : vector<1xf32>
    %45 = vector.multi_reduction <add>, %44, %cst_16 [1, 2] : vector<1x4x1xf32> to vector<1xf32>
    %46 = vector.shape_cast %45 : vector<1xf32> to vector<1x1x1xf32>
    %47 = vector.extract %46[0, 0, 0] : f32 from vector<1x1x1xf32>
    %48 = vector.broadcast %47 : f32 to vector<1x1xf32>
    %49 = arith.subf %25, %27 : vector<4x1xf32>
    %cst_17 = arith.constant 0.000000e+00 : f32
    %50 = vector.broadcast %cst_17 : f32 to vector<4x1xf32>
    %51 = arith.maximumf %49, %50 : vector<4x1xf32>
    %52 = arith.mulf %51, %34 : vector<4x1xf32>
    %53 = vector.shape_cast %52 : vector<4x1xf32> to vector<1x4x1xf32>
    %cst_18 = arith.constant dense<0.000000e+00> : vector<1xf32>
    %54 = vector.multi_reduction <add>, %53, %cst_18 [1, 2] : vector<1x4x1xf32> to vector<1xf32>
    %55 = vector.shape_cast %54 : vector<1xf32> to vector<1x1x1xf32>
    %56 = vector.extract %55[0, 0, 0] : f32 from vector<1x1x1xf32>
    %57 = vector.broadcast %56 : f32 to vector<1x1xf32>
    %cst_19 = arith.constant 0.000000e+00 : f32
    %58 = vector.broadcast %cst_19 : f32 to vector<1x1xf32>
    %59 = arith.cmpf ogt, %39, %58 : vector<1x1xf32>
    %60 = arith.addf %48, %57 : vector<1x1xf32>
    %cst_20 = arith.constant 1.000000e+00 : f32
    %61 = vector.broadcast %cst_20 : f32 to vector<1x1xf32>
    %62 = arith.maximumf %39, %61 : vector<1x1xf32>
    %63 = arith.divf %60, %62 : vector<1x1xf32>
    %cst_21 = arith.constant 0.000000e+00 : f32
    %64 = vector.broadcast %cst_21 : f32 to vector<1x1xf32>
    %65 = arith.select %59, %63, %64 : vector<1x1xi1>, vector<1x1xf32>
    %c0_22 = arith.constant 0 : index
    %c0_23 = arith.constant 0 : index
    %66 = vector.load %arg6[%c0_22, %c0_23] : memref<1x1xf32, #tpu.memory_space<vmem>>, vector<1x1xf32>
    tpu.vector_store %arg6[%c0_22, %c0_23], %65 {strides = array<i32>} : memref<1x1xf32, #tpu.memory_space<vmem>>, vector<1x1xf32>,
    return
  }
}

</mosaic_0001>

<llo_original>
// kernel: tpu_custom_call.1
$region0: #{tpu_custom_call.1}
  #allocation0 [shape = 'u32[]', space=smem, size = 0x4, offset = 0x4, fixed_abs, tag = 'smem constant byte address 0x4 - core index']
  #allocation1 [shape = 'u32[144,128]{1,0:T(1,128)}', space=vmem, size = 0x12000, scoped, tag = 'internal scratch']
  %s0 = inlined_call_operand.vmem [shape: bf16[12,128], index: 0, kind: input, shape index: {}]
  %s1 = inlined_call_operand.hbm [shape: bf16[128,512], index: 1, kind: input, shape index: {}]
  %s2 = inlined_call_operand.vmem [shape: f32[1,256], index: 2, kind: input, shape index: {}]
  %s3 = inlined_call_operand.vmem [shape: f32[1,256], index: 3, kind: input, shape index: {}]
  %s4 = inlined_call_operand.vmem [shape: f32[4,1], index: 4, kind: input, shape index: {}]
  %s5 = inlined_call_operand.vmem [shape: f32[4,1], index: 5, kind: input, shape index: {}]
  %s6 = inlined_call_operand.hbm [shape: f32[1,1], index: 6, kind: output, shape index: {}]
  %s7 = sld [smem:[#allocation0]]
  $region38: #{tpu_custom_call.1} parent=0
    _
  %s9 = ssub.s32 1, %s7
  %s10 = scalar_select 0, %s9, %s7
  $region1: #{tpu_custom_call.1} parent=0
    #allocation2 [shape = 'u8[131072]{0}', space=vmem, size = 0x20000, scoped, tag = 'input window, operand 1, single buffered']
    #allocation3 [shape = 's32[1]{0}', space=sflag, size = 0x4, scoped, tag = 'scoped memory for tpu_custom_call.1']
    #allocation4 [shape = 's32[1]{0}', space=sflag, size = 0x4, scoped, tag = 'scoped memory for tpu_custom_call.1']
    #allocation5 [shape = 'u8[512]{0}', space=vmem, size = 0x400, scoped, tag = 'output window, operand 0, single buffered']
    %11 = vsyncpa [#allocation3], 0
    %12 = vsyncpa [#allocation4], 0
    // Predicated region
    $region2: #{tpu_custom_call.1} parent=1 // pred_check
      _
    $region3: #{tpu_custom_call.1} parent=1 // pred_check_branch
      %14 = sbr.rel (0) target = $region5
    $region4: #{tpu_custom_call.1} parent=1 // pred_region
      _
    $region5: #{tpu_custom_call.1} parent=1 // pred_fallthru
      _
    // Predicated region
    $region6: #{tpu_custom_call.1} parent=1 // pred_check
      _
    $region7: #{tpu_custom_call.1} parent=1 // pred_check_branch
      %16 = sbr.rel (0) target = $region9
    $region8: #{tpu_custom_call.1} parent=1 // pred_region
      %s18 = ssub.s32 4096, 4096
      %19 = vsyncadd [#allocation3], %s18
      %s20 = sshll.u32 [#allocation2], 4
      %s21 = int_to_ptr.vmem [resolvable:$true] %s20
      %26 = dma.hbm_to_vmem [thread:$0]  %s1, 4096, %s21, [#allocation3], 256, 256, 16
    $region9: #{tpu_custom_call.1} parent=1 // pred_fallthru
      _
    // Predicated region
    $region10: #{tpu_custom_call.1} parent=1 // pred_check
      _
    $region11: #{tpu_custom_call.1} parent=1 // pred_check_branch
      %28 = sbr.rel (0) target = $region13
    $region12: #{tpu_custom_call.1} parent=1 // pred_region
      _
    $region13: #{tpu_custom_call.1} parent=1 // pred_fallthru
      _
    // Predicated region
    $region14: #{tpu_custom_call.1} parent=1 // pred_check
      _
    $region15: #{tpu_custom_call.1} parent=1 // pred_check_branch
      %30 = sbr.rel (0) target = $region17
    $region16: #{tpu_custom_call.1} parent=1 // pred_region
      _
    $region17: #{tpu_custom_call.1} parent=1 // pred_fallthru
      _
    // Predicated region
    $region18: #{tpu_custom_call.1} parent=1 // pred_check
      _
    $region19: #{tpu_custom_call.1} parent=1 // pred_check_branch
      %32 = sbr.rel (0) target = $region21
    $region20: #{tpu_custom_call.1} parent=1 // pred_region
      _
    $region21: #{tpu_custom_call.1} parent=1 // pred_fallthru
      _
    // Predicated region
    $region22: #{tpu_custom_call.1} parent=1 // pred_check
      _
    $region23: #{tpu_custom_call.1} parent=1 // pred_check_branch
      %34 = sbr.rel (0) target = $region25
    $region24: #{tpu_custom_call.1} parent=1 // pred_region
      _
    $region25: #{tpu_custom_call.1} parent=1 // pred_fallthru
      _
    // Predicated region
    $region26: #{tpu_custom_call.1} parent=1 // pred_check
      _
    $region27: #{tpu_custom_call.1} parent=1 // pred_check_branch
      %36 = sbr.rel (0) target = $region29
    $region28: #{tpu_custom_call.1} parent=1 // pred_region
      %37 = dma.done [#allocation3], 4096
    $region29: #{tpu_custom_call.1} parent=1 // pred_fallthru
      _
    %v39 = vld [vmem:[%s0] sm:$0xf]
    %v40 = vld [vmem:[%s0 + $0x4] sm:$0x3]
    %v41 = vld [vmem:[#allocation2] sm:$0xff]
    %v42 = vld [vmem:[#allocation2 + $0x8] sm:$0xff]
    %v43 = vld [vmem:[#allocation2 + $0x10] sm:$0xff]
    %v44 = vld [vmem:[#allocation2 + $0x18] sm:$0xff]
    %v45 = vld [vmem:[#allocation2 + $0x20] sm:$0xff]
    %v46 = vld [vmem:[#allocation2 + $0x28] sm:$0xff]
    %v47 = vld [vmem:[#allocation2 + $0x30] sm:$0xff]
    %v48 = vld [vmem:[#allocation2 + $0x38] sm:$0xff]
    %v49 = vld [vmem:[#allocation2 + $0x40] sm:$0xff]
    %v50 = vld [vmem:[#allocation2 + $0x48] sm:$0xff]
    %v51 = vld [vmem:[#allocation2 + $0x50] sm:$0xff]
    %v52 = vld [vmem:[#allocation2 + $0x58] sm:$0xff]
    %v53 = vld [vmem:[#allocation2 + $0x60] sm:$0xff]
    %v54 = vld [vmem:[#allocation2 + $0x68] sm:$0xff]
    %v55 = vld [vmem:[#allocation2 + $0x70] sm:$0xff]
    %v56 = vld [vmem:[#allocation2 + $0x78] sm:$0xff]
    %v57 = vld [vmem:[#allocation2 + $0x80] sm:$0xff]
    %v58 = vld [vmem:[#allocation2 + $0x88] sm:$0xff]
    %v59 = vld [vmem:[#allocation2 + $0x90] sm:$0xff]
    %v60 = vld [vmem:[#allocation2 + $0x98] sm:$0xff]
    %v61 = vld [vmem:[#allocation2 + $0xa0] sm:$0xff]
    %v62 = vld [vmem:[#allocation2 + $0xa8] sm:$0xff]
    %v63 = vld [vmem:[#allocation2 + $0xb0] sm:$0xff]
    %v64 = vld [vmem:[#allocation2 + $0xb8] sm:$0xff]
    %v65 = vld [vmem:[#allocation2 + $0xc0] sm:$0xff]
    %v66 = vld [vmem:[#allocation2 + $0xc8] sm:$0xff]
    %v67 = vld [vmem:[#allocation2 + $0xd0] sm:$0xff]
    %v68 = vld [vmem:[#allocation2 + $0xd8] sm:$0xff]
    %v69 = vld [vmem:[#allocation2 + $0xe0] sm:$0xff]
    %v70 = vld [vmem:[#allocation2 + $0xe8] sm:$0xff]
    %v71 = vld [vmem:[#allocation2 + $0xf0] sm:$0xff]
    %v72 = vld [vmem:[#allocation2 + $0xf8] sm:$0xff]
    %v75 = vunpack.c.l.b16 %v39
    %v76 = vunpack.c.l.b16 %v40
    %v77 = vpack.c.b16 %v76, %v75
    %v111 = vunpack.c.l.b16 %v41
    %v112 = vunpack.c.h.b16 %v41
    %v113 = vunpack.c.l.b16 %v42
    %v114 = vunpack.c.h.b16 %v42
    %v115 = vunpack.c.l.b16 %v43
    %v116 = vunpack.c.h.b16 %v43
    %v117 = vunpack.c.l.b16 %v44
    %v118 = vunpack.c.h.b16 %v44
    %v119 = vunpack.c.l.b16 %v45
    %v120 = vunpack.c.h.b16 %v45
    %v121 = vunpack.c.l.b16 %v46
    %v122 = vunpack.c.h.b16 %v46
    %v123 = vunpack.c.l.b16 %v47
    %v124 = vunpack.c.h.b16 %v47
    %v125 = vunpack.c.l.b16 %v48
    %v126 = vunpack.c.h.b16 %v48
    %v127 = vunpack.c.l.b16 %v49
    %v128 = vunpack.c.h.b16 %v49
    %v129 = vunpack.c.l.b16 %v50
    %v130 = vunpack.c.h.b16 %v50
    %v131 = vunpack.c.l.b16 %v51
    %v132 = vunpack.c.h.b16 %v51
    %v133 = vunpack.c.l.b16 %v52
    %v134 = vunpack.c.h.b16 %v52
    %v135 = vunpack.c.l.b16 %v53
    %v136 = vunpack.c.h.b16 %v53
    %v137 = vunpack.c.l.b16 %v54
    %v138 = vunpack.c.h.b16 %v54
    %v139 = vunpack.c.l.b16 %v55
    %v140 = vunpack.c.h.b16 %v55
    %v141 = vunpack.c.l.b16 %v56
    %v142 = vunpack.c.h.b16 %v56
    %v143 = vunpack.c.l.b16 %v57
    %v144 = vunpack.c.h.b16 %v57
    %v145 = vunpack.c.l.b16 %v58
    %v146 = vunpack.c.h.b16 %v58
    %v147 = vunpack.c.l.b16 %v59
    %v148 = vunpack.c.h.b16 %v59
    %v149 = vunpack.c.l.b16 %v60
    %v150 = vunpack.c.h.b16 %v60
    %v151 = vunpack.c.l.b16 %v61
    %v152 = vunpack.c.h.b16 %v61
    %v153 = vunpack.c.l.b16 %v62
    %v154 = vunpack.c.h.b16 %v62
    %v155 = vunpack.c.l.b16 %v63
    %v156 = vunpack.c.h.b16 %v63
    %v157 = vunpack.c.l.b16 %v64
    %v158 = vunpack.c.h.b16 %v64
    %v159 = vunpack.c.l.b16 %v65
    %v160 = vunpack.c.h.b16 %v65
    %v161 = vunpack.c.l.b16 %v66
    %v162 = vunpack.c.h.b16 %v66
    %v163 = vunpack.c.l.b16 %v67
    %v164 = vunpack.c.h.b16 %v67
    %v165 = vunpack.c.l.b16 %v68
    %v166 = vunpack.c.h.b16 %v68
    %v167 = vunpack.c.l.b16 %v69
    %v168 = vunpack.c.h.b16 %v69
    %v169 = vunpack.c.l.b16 %v70
    %v170 = vunpack.c.h.b16 %v70
    %v171 = vunpack.c.l.b16 %v71
    %v172 = vunpack.c.h.b16 %v71
    %v173 = vunpack.c.l.b16 %v72
    %v174 = vunpack.c.h.b16 %v72
    %v175 = vpack.c.b16 %v115, %v111
    %v176 = vpack.c.b16 %v116, %v112
    %v177 = vpack.c.b16 %v117, %v113
    %v178 = vpack.c.b16 %v118, %v114
    %v179 = vpack.c.b16 %v123, %v119
    %v180 = vpack.c.b16 %v124, %v120
    %v181 = vpack.c.b16 %v125, %v121
    %v182 = vpack.c.b16 %v126, %v122
    %v183 = vpack.c.b16 %v131, %v127
    %v184 = vpack.c.b16 %v132, %v128
    %v185 = vpack.c.b16 %v133, %v129
    %v186 = vpack.c.b16 %v134, %v130
    %v187 = vpack.c.b16 %v139, %v135
    %v188 = vpack.c.b16 %v140, %v136
    %v189 = vpack.c.b16 %v141, %v137
    %v190 = vpack.c.b16 %v142, %v138
    %v191 = vpack.c.b16 %v147, %v143
    %v192 = vpack.c.b16 %v148, %v144
    %v193 = vpack.c.b16 %v149, %v145
    %v194 = vpack.c.b16 %v150, %v146
    %v195 = vpack.c.b16 %v155, %v151
    %v196 = vpack.c.b16 %v156, %v152
    %v197 = vpack.c.b16 %v157, %v153
    %v198 = vpack.c.b16 %v158, %v154
    %v199 = vpack.c.b16 %v163, %v159
    %v200 = vpack.c.b16 %v164, %v160
    %v201 = vpack.c.b16 %v165, %v161
    %v202 = vpack.c.b16 %v166, %v162
    %v203 = vpack.c.b16 %v171, %v167
    %v204 = vpack.c.b16 %v172, %v168
    %v205 = vpack.c.b16 %v173, %v169
    %v206 = vpack.c.b16 %v174, %v170
    %239 = vmatprep.subr.bf16.mxu0 %v204
    %240 = vmatpush1.bf16.msra.mxu0 %v203
    %241 = vmatprep.subr.bf16.mxu0 %v200
    %242 = vmatpush1.bf16.msra.mxu0 %v199
    %243 = vmatprep.subr.bf16.mxu0 %v196
    %244 = vmatpush1.bf16.msra.mxu0 %v195
    %245 = vmatprep.subr.bf16.mxu0 %v192
    %246 = vmatpush1.bf16.msra.mxu0 %v191
    %247 = vmatprep.subr.bf16.mxu0 %v188
    %248 = vmatpush1.bf16.msra.mxu0 %v187
    %249 = vmatprep.subr.bf16.mxu0 %v184
    %250 = vmatpush1.bf16.msra.mxu0 %v183
    %251 = vmatprep.subr.bf16.mxu0 %v180
    %252 = vmatpush1.bf16.msra.mxu0 %v179
    %253 = vmatprep.subr.bf16.mxu0 %v176
    %254 = vmatpush1.bf16.msra.mxu0 %v175
    %255 = vmatprep.subr.bf16.mxu0 0
    %256 = vmatpush2.bf16.msra.mxu0 0
    %257 = vmatprep.subr.bf16.mxu0 0
    %258 = vmatpush2.bf16.msra.mxu0 0
    %259 = vmatprep.subr.bf16.mxu0 0
    %260 = vmatpush2.bf16.msra.mxu0 0
    %261 = vmatprep.subr.bf16.mxu0 0
    %262 = vmatpush2.bf16.msra.mxu0 0
    %263 = vmatprep.subr.bf16.mxu0 0
    %264 = vmatpush2.bf16.msra.mxu0 0
    %265 = vmatprep.subr.bf16.mxu0 0
    %266 = vmatpush2.bf16.msra.mxu0 0
    %267 = vmatprep.subr.bf16.mxu0 0
    %268 = vmatpush2.bf16.msra.mxu0 0
    %269 = vmatprep.subr.bf16.mxu0 0
    %270 = vmatpush2.bf16.msra.mxu0 0
    %271 = vmatprep.mubr.bf16.mxu0 0
    %272 = vmatmul.mubr.bf16.gmra.mxu0 %v77
    %v273 = vpop.f32.mrf.mxu0
    %v274 = vadd.f32 0.0, %v273
    %v275 = vpop.f32.mrf.mxu0
    %v276 = vadd.f32 0.0, %v275
    %v277 = vpop.f32.mrf.mxu0
    %v278 = vadd.f32 0.0, %v277
    %v279 = vpop.f32.mrf.mxu0
    %v280 = vadd.f32 0.0, %v279
    %281 = vdwg.mxu0
    %282 = vmatprep.subr.bf16.mxu0 %v206
    %283 = vmatpush1.bf16.msra.mxu0 %v205
    %284 = vmatprep.subr.bf16.mxu0 %v202
    %285 = vmatpush1.bf16.msra.mxu0 %v201
    %286 = vmatprep.subr.bf16.mxu0 %v198
    %287 = vmatpush1.bf16.msra.mxu0 %v197
    %288 = vmatprep.subr.bf16.mxu0 %v194
    %289 = vmatpush1.bf16.msra.mxu0 %v193
    %290 = vmatprep.subr.bf16.mxu0 %v190
    %291 = vmatpush1.bf16.msra.mxu0 %v189
    %292 = vmatprep.subr.bf16.mxu0 %v186
    %293 = vmatpush1.bf16.msra.mxu0 %v185
    %294 = vmatprep.subr.bf16.mxu0 %v182
    %295 = vmatpush1.bf16.msra.mxu0 %v181
    %296 = vmatprep.subr.bf16.mxu0 %v178
    %297 = vmatpush1.bf16.msra.mxu0 %v177
    %298 = vmatprep.subr.bf16.mxu0 0
    %299 = vmatpush2.bf16.msra.mxu0 0
    %300 = vmatprep.subr.bf16.mxu0 0
    %301 = vmatpush2.bf16.msra.mxu0 0
    %302 = vmatprep.subr.bf16.mxu0 0
    %303 = vmatpush2.bf16.msra.mxu0 0
    %304 = vmatprep.subr.bf16.mxu0 0
    %305 = vmatpush2.bf16.msra.mxu0 0
    %306 = vmatprep.subr.bf16.mxu0 0
    %307 = vmatpush2.bf16.msra.mxu0 0
    %308 = vmatprep.subr.bf16.mxu0 0
    %309 = vmatpush2.bf16.msra.mxu0 0
    %310 = vmatprep.subr.bf16.mxu0 0
    %311 = vmatpush2.bf16.msra.mxu0 0
    %312 = vmatprep.subr.bf16.mxu0 0
    %313 = vmatpush2.bf16.msra.mxu0 0
    %314 = vmatprep.mubr.bf16.mxu0 0
    %315 = vmatmul.mubr.bf16.gmra.mxu0 %v77
    %v316 = vpop.f32.mrf.mxu0
    %v317 = vadd.f32 0.0, %v316
    %v318 = vpop.f32.mrf.mxu0
    %v319 = vadd.f32 0.0, %v318
    %v320 = vpop.f32.mrf.mxu0
    %v321 = vadd.f32 0.0, %v320
    %v322 = vpop.f32.mrf.mxu0
    %v323 = vadd.f32 0.0, %v322
    %324 = vdwg.mxu0
    %v325 = vmul.f32 %v274, %v274
    %v326 = vmul.f32 %v276, %v276
    %v327 = vmul.f32 %v278, %v278
    %v328 = vmul.f32 %v280, %v280
    %v329 = vmul.f32 %v317, %v317
    %v330 = vmul.f32 %v319, %v319
    %v331 = vmul.f32 %v321, %v321
    %v332 = vmul.f32 %v323, %v323
    %v333 = vadd.f32 %v325, %v329
    %v334 = vadd.f32 %v326, %v330
    %v335 = vadd.f32 %v327, %v331
    %v336 = vadd.f32 %v328, %v332
    %v337 = vld [vmem:[%s3] sm:$0x3]
    %v339 = vlaneseq
    %v340 = vshrl.u32 %v339, 7
    %v341 = vsub.s32 0, %v340
    %v342 = vrot.slane %v337, %v341
    %v343 = vlaneseq
    %v344 = vshrl.u32 %v343, 7
    %v345 = vsub.s32 1, %v344
    %v346 = vrot.slane %v337, %v345
    %v349 = vadd.f32 %v333, %v342
    %v350 = vadd.f32 %v334, %v346
    %v351 = vadd.f32 %v335, %v342
    %v352 = vadd.f32 %v336, %v346
    %v353 = vmax.f32 %v349, %v350
    %354 = vmax.xlane.f32.xlu0 %v353
    %v355 = vpop.xlane.xlu0 %354
    %vm356 = vcmask 1043456
    %v357 = vsel %vm356, %v351, -inf
    %v358 = vsel %vm356, %v352, -inf
    %v359 = vmax.f32 %v357, %v358
    %360 = vmax.xlane.f32.xlu0 %v359
    %v361 = vpop.xlane.xlu0 %360
    %v362 = vsub.f32 %v349, %v355
    %v363 = vsub.f32 %v350, %v355
    %v364 = vsub.f32 %v351, %v361
    %v365 = vsub.f32 %v352, %v361
    %v366 = vmul.f32 %v362, 1.442695
    %v367 = vpow.pop %v366
    %v368 = vmul.f32 %v363, 1.442695
    %v369 = vpow.pop %v368
    %v370 = vmul.f32 %v364, 1.442695
    %v371 = vpow.pop %v370
    %v372 = vmul.f32 %v365, 1.442695
    %v373 = vpow.pop %v372
    %v374 = vld [vmem:[%s2] sm:$0x3]
    %v376 = vlaneseq
    %v377 = vshrl.u32 %v376, 7
    %v378 = vsub.s32 0, %v377
    %v379 = vrot.slane %v374, %v378
    %v380 = vlaneseq
    %v381 = vshrl.u32 %v380, 7
    %v382 = vsub.s32 1, %v381
    %v383 = vrot.slane %v374, %v382
    %v386 = vmul.f32 %v367, %v379
    %v387 = vmul.f32 %v369, %v383
    %v388 = vmul.f32 %v371, %v379
    %v389 = vmul.f32 %v373, %v383
    %v390 = vadd.f32 %v386, %v387
    %391 = vadd.xlane.f32.xlu0 %v390
    %v392 = vpop.xlane.xlu0 %391
    %v393 = vsel %vm356, %v388, 0.0
    %v394 = vsel %vm356, %v389, 0.0
    %v395 = vadd.f32 %v393, %v394
    %396 = vadd.xlane.f32.xlu0 %v395
    %v397 = vpop.xlane.xlu0 %396
    %v398 = vadd.f32 %v367, %v369
    %399 = vadd.xlane.f32.xlu0 %v398
    %v400 = vpop.xlane.xlu0 %399
    %v401 = vsel %vm356, %v371, 0.0
    %v402 = vsel %vm356, %v373, 0.0
    %v403 = vadd.f32 %v401, %v402
    %404 = vadd.xlane.f32.xlu0 %v403
    %v405 = vpop.xlane.xlu0 %404
    %v406 = vrcp.pop %v400
    %v407 = vrcp.pop %v405
    %v408 = vmul.f32 %v392, %v406
    %v409 = vmul.f32 %v397, %v407
    %v410 = vld [vmem:[%s4] sm:$0xf]
    %vm411 = vcmp.ge.f32.partialorder %v408, %v410
    %v412 = vld [vmem:[%s5] sm:$0xf]
    %vm413 = vcmp.le.f32.partialorder %v408, %v412
    %vm414 = vmand %vm411, %vm413
    %v415 = vsel %vm414, 1, 0
    %v416 = vcvt.s32.f32 %v415
    %vm417 = vcmask 3072
    %v418 = vsel %vm417, %v416, 0.0
    %419 = vadd.xlane.f32.xlu0 %v418
    %v420 = vpop.xlane.xlu0 %419
    %v421 = vrot.slane %v420, 4
    %v422 = vadd.f32 %v420, %v421
    %v423 = vrot.slane %v422, 2
    %v424 = vadd.f32 %v422, %v423
    %v425 = vrot.slane %v424, 1
    %v426 = vadd.f32 %v424, %v425
    %s427 = vtos %v426
    %v428 = vstv %s427
    %v430 = vrot.slane %v408, 4
    %v432 = vsub.f32 %v408, %v430
    %v433 = vmax.f32 %v432, 0.0
    %v435 = vrot.slane %v416, 4
    %v437 = vmul.f32 %v433, %v435
    %v439 = vrot.slane %v437, 4
    %v441 = vsel %vm417, %v439, 0.0
    %442 = vadd.xlane.f32.xlu0 %v441
    %v443 = vpop.xlane.xlu0 %442
    %v444 = vrot.slane %v443, 4
    %v445 = vadd.f32 %v443, %v444
    %v446 = vrot.slane %v445, 2
    %v447 = vadd.f32 %v445, %v446
    %v448 = vrot.slane %v447, 1
    %v449 = vadd.f32 %v447, %v448
    %s450 = vtos %v449
    %v451 = vstv %s450
    %v452 = vsub.f32 %v408, %v409
    %v453 = vmax.f32 %v452, 0.0
    %v454 = vmul.f32 %v453, %v416
    %v455 = vsel %vm417, %v454, 0.0
    %456 = vadd.xlane.f32.xlu0 %v455
    %v457 = vpop.xlane.xlu0 %456
    %v458 = vrot.slane %v457, 4
    %v459 = vadd.f32 %v457, %v458
    %v460 = vrot.slane %v459, 2
    %v461 = vadd.f32 %v459, %v460
    %v462 = vrot.slane %v461, 1
    %v463 = vadd.f32 %v461, %v462
    %s464 = vtos %v463
    %v465 = vstv %s464
    %vm466 = vcmp.gt.f32.partialorder %v428, 0.0
    %v467 = vadd.f32 %v451, %v465
    %v468 = vmax.f32 %v428, 1.0
    %v469 = vrcp.pop %v468
    %v470 = vmul.f32 %v467, %v469
    %v471 = vsel %vm466, %v470, 0.0
    %vm472 = vcmask 0
    %473 = vst.msk [vmem:[#allocation5] sm:$0x1] %vm472, %v471
    // Predicated region
    $region30: #{tpu_custom_call.1} parent=1 // pred_check
      _
    $region31: #{tpu_custom_call.1} parent=1 // pred_check_branch
      %475 = sbr.rel (0) target = $region33
    $region32: #{tpu_custom_call.1} parent=1 // pred_region
      %s477 = ssub.s32 16, 16
      %478 = vsyncadd [#allocation4], %s477
      %s480 = sshll.u32 [#allocation5], 4
      %s481 = int_to_ptr.vmem [resolvable:$true] %s480
      %483 = dma.vmem_to_hbm [thread:$0]  %s481, 16, %s6, [#allocation4]
    $region33: #{tpu_custom_call.1} parent=1 // pred_fallthru
      _
    // Predicated region
    $region34: #{tpu_custom_call.1} parent=1 // pred_check
      _
    $region35: #{tpu_custom_call.1} parent=1 // pred_check_branch
      %485 = sbr.rel (0) target = $region37
    $region36: #{tpu_custom_call.1} parent=1 // pred_region
      %486 = dma.done [#allocation4], 16
    $region37: #{tpu_custom_call.1} parent=1 // pred_fallthru
      _
    %487 = vsyncpa [#allocation3], 1
    %488 = vsyncpa [#allocation4], 1

</llo_original>
